<compile_context>
chip_gen: v7x
topology: tpu7x:2x2x1
jax: 0.10.0
libtpu: 0.0.40
codegen_flags: <defaults>
</compile_context>

<pallas_src>
import functools

import jax
import jax.numpy as jnp
from jax.experimental import pallas as pl
from jax.experimental.pallas import tpu as pltpu


def _chunk_specs(split_sizes):
    """(start, size) list exactly matching the PyTorch loop (current_pos = l)."""
    specs = []
    current_pos = 0
    for l in split_sizes:
        specs.append((current_pos, l))
        current_pos = l  # reproduce the reference exactly (not +=)
    return specs


def _make_split_kernel(chunk_specs):
    def kernel(x_ref, *out_refs):
        # Static slices on the Ref -> one VMEM window load + one store per
        # chunk; no full-tile vreg materialization beyond the slice itself.
        for (start, size), o_ref in zip(chunk_specs, out_refs):
            o_ref[...] = x_ref[:, start:start + size]
    return kernel


def _pick_block_rows(batch, feat, sum_sizes, itemsize, requested=None):
    """Choose the batch-tile so the double-buffered step fits a VMEM budget."""
    if requested is not None:
        tb = min(batch, int(requested))
    else:
        # ~8 MiB of live data per pipeline step (in-tile + all out-tiles);
        # double-buffering brings that to ~16 MiB, safe on every chip.
        budget_bytes = 8 * 2**20
        per_row_bytes = max(1, (feat + sum_sizes) * itemsize)
        tb = budget_bytes // per_row_bytes
        tb = min(tb, batch, 4096)
    if tb >= 8:
        tb = (tb // 8) * 8      # keep the sublane block dim 8-aligned
    else:
        tb = batch              # tiny batch: one full-array block (exempt)
    return max(int(tb), 1)


@functools.partial(jax.jit, static_argnames=("split_sizes", "block_rows"))
def split_layer(x, split_sizes, block_rows=None):
    """Pallas implementation of SplitLayer.forward for x of shape [B, F]."""
    B, F = x.shape
    chunk_specs = tuple(_chunk_specs(split_sizes))
    for start, size in chunk_specs:
        if start + size > F:
            raise ValueError("split exceeds feature dim")

    sum_sizes = sum(size for _, size in chunk_specs)
    itemsize = jnp.dtype(x.dtype).itemsize

    tb = _pick_block_rows(B, F, sum_sizes, itemsize, block_rows)
    b_padded = pl.cdiv(B, tb) * tb
    x_in = x if b_padded == B else jnp.pad(x, ((0, b_padded - B), (0, 0)))

    per_step_bytes = tb * (F + sum_sizes) * itemsize
    # double-buffered in + outs, with headroom; capped well below any chip's VMEM
    vmem_bytes = int(min(48 * 2**20, max(4 * 2**20, 3 * per_step_bytes)))

    out_shapes = tuple(
        jax.ShapeDtypeStruct((b_padded, size), x.dtype) for _, size in chunk_specs
    )

    bytes_moved = b_padded * (F + sum_sizes) * itemsize
    outs = pl.pallas_call(
        _make_split_kernel(chunk_specs),
        out_shape=out_shapes,
        grid=(b_padded // tb,),
        in_specs=[pl.BlockSpec((tb, F), lambda i: (i, 0))],
        out_specs=tuple(
            pl.BlockSpec((tb, size), lambda i: (i, 0)) for _, size in chunk_specs
        ),
        compiler_params=pltpu.CompilerParams(
            dimension_semantics=("parallel",),
            vmem_limit_bytes=vmem_bytes,
        ),
        cost_estimate=pl.CostEstimate(
            flops=0, transcendentals=0, bytes_accessed=bytes_moved
        ),
    )(x_in)

    if b_padded != B:
        outs = tuple(o[:B] for o in outs)
    return outs


def split_layer_ref(x, split_sizes):
    """Pure-JAX reference mirroring the PyTorch code line-by-line."""
    current_pos = 0
    chunks = []
    for l in split_sizes:
        chunks.append(x[:, current_pos:current_pos + l])
        current_pos = l
    return tuple(chunks)


if __name__ == "__main__":
    key = jax.random.PRNGKey(0)
    k1, k2 = jax.random.split(key)
    split_sizes = (8, 16, 12)   # chunk0=[0:8], chunk1=[8:24], chunk2=[16:28]

    # Case 1: batch divisible by the block -> tiled grid, no padding.
    B, F = 32, 64
    x = jax.random.normal(k1, (B, F), dtype=jnp.float32)
    outs = jax.block_until_ready(split_layer(x, split_sizes, block_rows=8))
    refs = split_layer_ref(x, split_sizes)
    assert len(outs) == len(refs)
    for o, r in zip(outs, refs):
        assert o.shape == r.shape, (o.shape, r.shape)
        assert jnp.array_equal(o, r), "mismatch vs reference (case 1)"

    # Case 2: batch NOT divisible by the block -> padded grid + trim.
    B2 = 20
    x2 = jax.random.normal(k2, (B2, F), dtype=jnp.float32)
    outs2 = jax.block_until_ready(split_layer(x2, split_sizes, block_rows=8))
    refs2 = split_layer_ref(x2, split_sizes)
    for o, r in zip(outs2, refs2):
        assert o.shape == r.shape, (o.shape, r.shape)
        assert jnp.array_equal(o, r), "mismatch vs reference (case 2)"

    # Case 3: auto block-rows path (VMEM-budget-derived tile).
    outs3 = jax.block_until_ready(split_layer(x, split_sizes))
    for o, r in zip(outs3, refs):
        assert jnp.array_equal(o, r), "mismatch vs reference (case 3)"

    print("KERNEL_OK")
</pallas_src>

<mosaic_0001>
module attributes {stable_mosaic.version = 11 : i64} {
  func.func @kernel(%arg0: i32, %arg1: memref<8x64xf32, #tpu.memory_space<vmem>>, %arg2: memref<8x8xf32, #tpu.memory_space<vmem>>, %arg3: memref<8x16xf32, #tpu.memory_space<vmem>>, %arg4: memref<8x12xf32, #tpu.memory_space<vmem>>) attributes {dimension_semantics = [#tpu.dimension_semantics<parallel>], iteration_bounds = array<i64: 4>, scalar_prefetch = 0 : i64, scratch_operands = 0 : i64, tpu.core_type = #tpu.core_type<tc>, window_params = [{transform_indices = @transform_0, window_bounds = array<i64: 8, 64>}, {transform_indices = @transform_1, window_bounds = array<i64: 8, 8>}, {transform_indices = @transform_2, window_bounds = array<i64: 8, 16>}, {transform_indices = @transform_3, window_bounds = array<i64: 8, 12>}]} {
    %c0 = arith.constant 0 : index
    %c0_0 = arith.constant 0 : index
    %0 = vector.load %arg1[%c0, %c0_0] : memref<8x64xf32, #tpu.memory_space<vmem>>, vector<8x8xf32>
    %c0_1 = arith.constant 0 : index
    %c0_2 = arith.constant 0 : index
    %1 = vector.load %arg2[%c0_1, %c0_2] : memref<8x8xf32, #tpu.memory_space<vmem>>, vector<8x8xf32>
    tpu.vector_store %arg2[%c0_1, %c0_2], %0 {strides = array<i32>} : memref<8x8xf32, #tpu.memory_space<vmem>>, vector<8x8xf32>,
    %c0_3 = arith.constant 0 : index
    %c8 = arith.constant 8 : index
    %2 = vector.load %arg1[%c0_3, %c8] : memref<8x64xf32, #tpu.memory_space<vmem>>, vector<8x16xf32>
    %c0_4 = arith.constant 0 : index
    %c0_5 = arith.constant 0 : index
    %3 = vector.load %arg3[%c0_4, %c0_5] : memref<8x16xf32, #tpu.memory_space<vmem>>, vector<8x16xf32>
    tpu.vector_store %arg3[%c0_4, %c0_5], %2 {strides = array<i32>} : memref<8x16xf32, #tpu.memory_space<vmem>>, vector<8x16xf32>,
    %c0_6 = arith.constant 0 : index
    %c16 = arith.constant 16 : index
    %4 = vector.load %arg1[%c0_6, %c16] : memref<8x64xf32, #tpu.memory_space<vmem>>, vector<8x12xf32>
    %c0_7 = arith.constant 0 : index
    %c0_8 = arith.constant 0 : index
    %5 = vector.load %arg4[%c0_7, %c0_8] : memref<8x12xf32, #tpu.memory_space<vmem>>, vector<8x12xf32>
    tpu.vector_store %arg4[%c0_7, %c0_8], %4 {strides = array<i32>} : memref<8x12xf32, #tpu.memory_space<vmem>>, vector<8x12xf32>,
    return
  }
  func.func @transform_0(%arg0: i32) -> (i32, i32) {
    %c0_i32 = arith.constant 0 : i32
    %c0_i32_0 = arith.constant 0 : i32
    return %arg0, %c0_i32 : i32, i32
  }
  func.func @transform_1(%arg0: i32) -> (i32, i32) {
    %c0_i32 = arith.constant 0 : i32
    %c0_i32_0 = arith.constant 0 : i32
    return %arg0, %c0_i32 : i32, i32
  }
  func.func @transform_2(%arg0: i32) -> (i32, i32) {
    %c0_i32 = arith.constant 0 : i32
    %c0_i32_0 = arith.constant 0 : i32
    return %arg0, %c0_i32 : i32, i32
  }
  func.func @transform_3(%arg0: i32) -> (i32, i32) {
    %c0_i32 = arith.constant 0 : i32
    %c0_i32_0 = arith.constant 0 : i32
    return %arg0, %c0_i32 : i32, i32
  }
}

</mosaic_0001>

<llo_original>
// kernel: split_layer.1
$region0: #{split_layer.1}
  #allocation0 [shape = 'u32[]', space=smem, size = 0x4, offset = 0x4, fixed_abs, tag = 'smem constant byte address 0x4 - core index']
  #allocation1 [shape = 'u32[144,128]{1,0:T(1,128)}', space=vmem, size = 0x12000, scoped, tag = 'internal scratch']
  %s0 = inlined_call_operand.hbm [shape: f32[32,64], index: 0, kind: input, shape index: {}]
  %s1 = inlined_call_operand.vmem [shape: f32[32,8], index: 1, kind: output, shape index: {0}]
  %s2 = inlined_call_operand.vmem [shape: f32[32,16], index: 2, kind: output, shape index: {1}]
  %s3 = inlined_call_operand.vmem [shape: f32[32,12], index: 3, kind: output, shape index: {2}]
  %4 = xla_tuple %s1, %s2, %s3
  %s5 = sld [smem:[#allocation0]]
  $region57: #{split_layer.1} parent=0
    _
  %s7 = ssub.s32 1, %s5
  %s8 = scalar_select 0, %s7, %s5
  $region1: #{split_layer.1} parent=0
    #allocation2 [shape = 'u8[8192]{0}', space=vmem, size = 0x2000, scoped, tag = 'input window, operand 0']
    #allocation3 [shape = 's32[2]{0}', space=sflag, size = 0x8, scoped, tag = 'scoped memory for split_layer.1']
    %9 = vsyncpa [#allocation3], 0
    %s10 = scalar_lea.sflag [#allocation3], 1
    %11 = vsyncpa %s10, 0
    loop: start=0, step=1, limit=6
    $region2: #{split_layer.1} parent=1 // loop_pre_header
      _
    $region3: #{split_layer.1} parent=1 // loop_header
      %s13 = sphi 0, %s17
      %p14 = scmp.ge.s32.totalorder %s13, 6
      %s23 = sphi 0, %s25
      %s26 = sphi 0, %s23
      %s27 = sphi 0, %s26
      %s43 = sphi 0, %s27
      %s49 = sphi 0, %s51
      %s52 = sphi 0, %s49
      %s53 = sphi 0, %s52
      %s69 = sphi 0, %s53
      %s75 = sphi 0, %s77
      %s78 = sphi 0, %s75
      %s79 = sphi 0, %s78
      %s95 = sphi 0, %s79
      %s101 = sphi 0, %s103
      %s104 = sphi 0, %s101
      %s105 = sphi 0, %s104
      %s121 = sphi 0, %s105
    $region4: #{split_layer.1} parent=1 // loop_header_branch
      %16 = sbr.rel (%p14) target = $region8
    $region5: #{split_layer.1} parent=1 // loop_body
      %s18 = ssub.s32 %s13, 1
      %s19 = ssub.s32 %s13, 2
      %s20 = sadd.s32 %s13, 1
      %s21 = ssub.s32 %s13, %s20
      %p22 = scmp.eq.s32.totalorder %s21, 0
      %s24 = sadd.s32 %s23, 1
      %s25 = scalar_select %p22, %s23, %s24
      %p28 = pneg %p22
      %p29 = scmp.eq.s32.totalorder %s13, 3
      %p30 = por %p28, %p29
      %p31 = scmp.ne.s32.totalorder %s23, %s26
      %p32 = scmp.eq.s32.totalorder %s13, 0
      %p33 = por %p31, %p32
      %p34 = scmp.ne.s32.totalorder %s23, %s26
      %p35 = scmp.eq.s32.totalorder %s18, 3
      %p36 = por %p34, %p35
      %p37 = scmp.ne.s32.totalorder %s26, %s27
      %p38 = scmp.eq.s32.totalorder %s18, 0
      %p39 = por %p37, %p38
      %p40 = scmp.ne.s32.totalorder %s26, %s27
      %p41 = scmp.eq.s32.totalorder %s19, 3
      %p42 = por %p40, %p41
      %p44 = scmp.ne.s32.totalorder %s27, %s43
      %p45 = scmp.eq.s32.totalorder %s19, 0
      %p46 = por %p44, %p45
      %s47 = ssub.s32 %s13, %s20
      %p48 = scmp.eq.s32.totalorder %s47, 0
      %s50 = sadd.s32 %s49, 1
      %s51 = scalar_select %p48, %s49, %s50
      %p54 = pneg %p48
      %p55 = scmp.eq.s32.totalorder %s13, 3
      %p56 = por %p54, %p55
      %p57 = scmp.ne.s32.totalorder %s49, %s52
      %p58 = scmp.eq.s32.totalorder %s13, 0
      %p59 = por %p57, %p58
      %p60 = scmp.ne.s32.totalorder %s49, %s52
      %p61 = scmp.eq.s32.totalorder %s18, 3
      %p62 = por %p60, %p61
      %p63 = scmp.ne.s32.totalorder %s52, %s53
      %p64 = scmp.eq.s32.totalorder %s18, 0
      %p65 = por %p63, %p64
      %p66 = scmp.ne.s32.totalorder %s52, %s53
      %p67 = scmp.eq.s32.totalorder %s19, 3
      %p68 = por %p66, %p67
      %p70 = scmp.ne.s32.totalorder %s53, %s69
      %p71 = scmp.eq.s32.totalorder %s19, 0
      %p72 = por %p70, %p71
      %s73 = ssub.s32 %s13, %s20
      %p74 = scmp.eq.s32.totalorder %s73, 0
      %s76 = sadd.s32 %s75, 1
      %s77 = scalar_select %p74, %s75, %s76
      %p80 = pneg %p74
      %p81 = scmp.eq.s32.totalorder %s13, 3
      %p82 = por %p80, %p81
      %p83 = scmp.ne.s32.totalorder %s75, %s78
      %p84 = scmp.eq.s32.totalorder %s13, 0
      %p85 = por %p83, %p84
      %p86 = scmp.ne.s32.totalorder %s75, %s78
      %p87 = scmp.eq.s32.totalorder %s18, 3
      %p88 = por %p86, %p87
      %p89 = scmp.ne.s32.totalorder %s78, %s79
      %p90 = scmp.eq.s32.totalorder %s18, 0
      %p91 = por %p89, %p90
      %p92 = scmp.ne.s32.totalorder %s78, %s79
      %p93 = scmp.eq.s32.totalorder %s19, 3
      %p94 = por %p92, %p93
      %p96 = scmp.ne.s32.totalorder %s79, %s95
      %p97 = scmp.eq.s32.totalorder %s19, 0
      %p98 = por %p96, %p97
      %s99 = ssub.s32 %s13, %s20
      %p100 = scmp.eq.s32.totalorder %s99, 0
      %s102 = sadd.s32 %s101, 1
      %s103 = scalar_select %p100, %s101, %s102
      %p106 = pneg %p100
      %p107 = scmp.eq.s32.totalorder %s13, 3
      %p108 = por %p106, %p107
      %p109 = scmp.ne.s32.totalorder %s101, %s104
      %p110 = scmp.eq.s32.totalorder %s13, 0
      %p111 = por %p109, %p110
      %p112 = scmp.ne.s32.totalorder %s101, %s104
      %p113 = scmp.eq.s32.totalorder %s18, 3
      %p114 = por %p112, %p113
      %p115 = scmp.ne.s32.totalorder %s104, %s105
      %p116 = scmp.eq.s32.totalorder %s18, 0
      %p117 = por %p115, %p116
      %p118 = scmp.ne.s32.totalorder %s104, %s105
      %p119 = scmp.eq.s32.totalorder %s19, 3
      %p120 = por %p118, %p119
      %p122 = scmp.ne.s32.totalorder %s105, %s121
      %p123 = scmp.eq.s32.totalorder %s19, 0
      %p124 = por %p122, %p123
      %p125 = scmp.le.s32.totalorder 1, %s13
      %p126 = scmp.lt.s32.totalorder %s13, 5
      %p127 = pnand %p125, %p126
      %p128 = pneg %p127
      // Predicated region
      $region9: #{split_layer.1} parent=5 // pred_check
        _
      $region10: #{split_layer.1} parent=5 // pred_check_branch
        %130 = sbr.rel (%p127) target = $region12
      $region11: #{split_layer.1} parent=5 // pred_region
        %s131 = ssub.s32 %s13, 1
      $region12: #{split_layer.1} parent=5 // pred_fallthru
        _
      %p132 = scmp.lt.s32.totalorder %s13, 4
      // Predicated region
      $region13: #{split_layer.1} parent=5 // pred_check
        %p133 = pneg %p132
      $region14: #{split_layer.1} parent=5 // pred_check_branch
        %135 = sbr.rel (%p133) target = $region16
      $region15: #{split_layer.1} parent=5 // pred_region
        // Predicated region
        $region17: #{split_layer.1} parent=15 // pred_check
          %p136 = pneg %p33
        $region18: #{split_layer.1} parent=15 // pred_check_branch
          %138 = sbr.rel (%p136) target = $region20
        $region19: #{split_layer.1} parent=15 // pred_region
          %s139 = sand.u32 %s23, 1
          %s140 = scalar_lea.sflag [#allocation3], %s139
          %s141 = sand.u32 %s23, 1
          %s142 = smul.addr %s141, 8
          %s143 = scalar_lea.vmem [#allocation2], %s142
          %s145 = ssub.s32 128, 128
          %146 = vsyncadd %s140, %s145
          %s147 = smul.addr %s13, 128
          %s148 = scalar_lea.hbm %s0, %s147
          %s150 = sshll.u32 %s143, 4
          %s151 = int_to_ptr.vmem [resolvable:$true] %s150
          %153 = dma.hbm_to_vmem [thread:$0]  %s148, 128, %s151, %s140
        $region20: #{split_layer.1} parent=15 // pred_fallthru
          _
      $region16: #{split_layer.1} parent=5 // pred_fallthru
        _
      %p154 = scmp.le.s32.totalorder 1, %s13
      %p155 = scmp.lt.s32.totalorder %s13, 5
      %p156 = pnand %p154, %p155
      %p157 = pneg %p156
      // Predicated region
      $region21: #{split_layer.1} parent=5 // pred_check
        _
      $region22: #{split_layer.1} parent=5 // pred_check_branch
        %159 = sbr.rel (%p156) target = $region24
      $region23: #{split_layer.1} parent=5 // pred_region
        %s160 = ssub.s32 %s13, 1
        %s161 = sand.u32 %s26, 1
        %s162 = scalar_lea.sflag [#allocation3], %s161
        %s163 = sand.u32 %s26, 1
        %s164 = smul.addr %s163, 8
        %s165 = scalar_lea.vmem [#allocation2], %s164
        // Predicated region
        $region25: #{split_layer.1} parent=23 // pred_check
          %p166 = pneg %p39
        $region26: #{split_layer.1} parent=23 // pred_check_branch
          %168 = sbr.rel (%p166) target = $region28
        $region27: #{split_layer.1} parent=23 // pred_region
          %169 = dma.done %s162, 128
        $region28: #{split_layer.1} parent=23 // pred_fallthru
          _
        %s170 = sand.u32 %s26, 1
        %s171 = scalar_lea.sflag [#allocation3], %s170
        %s172 = sand.u32 %s26, 1
        %s173 = smul.addr %s172, 8
        %s174 = scalar_lea.vmem [#allocation2], %s173
        %p175 = pneg %p39
        %p176 = pneg %p36
        %p177 = pneg %p65
        %p178 = pneg %p62
        %p179 = scmp.lt.s32.totalorder %s18, 3
        %s180 = scalar_select %p179, %s18, 3
        %s181 = smul.addr %s180, 8
        %s182 = scalar_lea.vmem %s1, %s181
        %p183 = pneg %p91
        %p184 = pneg %p88
        %p185 = scmp.lt.s32.totalorder %s18, 3
        %s186 = scalar_select %p185, %s18, 3
        %s187 = smul.addr %s186, 8
        %s188 = scalar_lea.vmem %s2, %s187
        %p189 = pneg %p117
        %p190 = pneg %p114
        %p191 = scmp.lt.s32.totalorder %s18, 3
        %s192 = scalar_select %p191, %s18, 3
        %s193 = smul.addr %s192, 8
        %s194 = scalar_lea.vmem %s3, %s193
        %p195 = scmp.lt.s32.totalorder %s18, 3
        %s196 = scalar_select %p195, %s18, 3
        %s197 = smul.addr %s196, 8
        %s198 = scalar_lea.vmem %s1, %s197
        %p199 = scmp.lt.s32.totalorder %s18, 3
        %s200 = scalar_select %p199, %s18, 3
        %s201 = smul.addr %s200, 8
        %s202 = scalar_lea.vmem %s2, %s201
        %p203 = scmp.lt.s32.totalorder %s18, 3
        %s204 = scalar_select %p203, %s18, 3
        %s205 = smul.addr %s204, 8
        %s206 = scalar_lea.vmem %s3, %s205
        %v207 = vld [vmem:[%s165] sm:$0xff]
        %vm208 = vcmask 64512
        %209 = vst.msk [vmem:[%s198] sm:$0xff] %vm208, %v207
        %v210 = vld [vmem:[%s165] sm:$0xff]
        %212 = vrot.lane.b32.xlu0 %v210, 120
        %v213 = vpop.permute.xlu0 %212
        %vm215 = vcmask 130048
        %216 = vst.msk [vmem:[%s202] sm:$0xff] %vm215, %v213
        %v217 = vld [vmem:[%s165] sm:$0xff]
        %219 = vrot.lane.b32.xlu0 %v217, 112
        %v220 = vpop.permute.xlu0 %219
        %vm222 = vcmask 97280
        %223 = vst.msk [vmem:[%s206] sm:$0xff] %vm222, %v220
        %p224 = scmp.lt.s32.totalorder %s18, 3
        %s225 = scalar_select %p224, %s18, 3
        %s226 = smul.addr %s225, 8
        %s227 = scalar_lea.vmem %s1, %s226
        %p228 = scmp.lt.s32.totalorder %s18, 3
        %s229 = scalar_select %p228, %s18, 3
        %s230 = smul.addr %s229, 8
        %s231 = scalar_lea.vmem %s2, %s230
        %p232 = scmp.lt.s32.totalorder %s18, 3
        %s233 = scalar_select %p232, %s18, 3
        %s234 = smul.addr %s233, 8
        %s235 = scalar_lea.vmem %s3, %s234
        // Predicated region
        $region29: #{split_layer.1} parent=23 // pred_check
          %p236 = pneg %p62
        $region30: #{split_layer.1} parent=23 // pred_check_branch
          %238 = sbr.rel (%p236) target = $region32
        $region31: #{split_layer.1} parent=23 // pred_region
          _
        $region32: #{split_layer.1} parent=23 // pred_fallthru
          _
        // Predicated region
        $region33: #{split_layer.1} parent=23 // pred_check
          %p239 = pneg %p88
        $region34: #{split_layer.1} parent=23 // pred_check_branch
          %241 = sbr.rel (%p239) target = $region36
        $region35: #{split_layer.1} parent=23 // pred_region
          _
        $region36: #{split_layer.1} parent=23 // pred_fallthru
          _
        // Predicated region
        $region37: #{split_layer.1} parent=23 // pred_check
          %p242 = pneg %p114
        $region38: #{split_layer.1} parent=23 // pred_check_branch
          %244 = sbr.rel (%p242) target = $region40
        $region39: #{split_layer.1} parent=23 // pred_region
          _
        $region40: #{split_layer.1} parent=23 // pred_fallthru
          _
      $region24: #{split_layer.1} parent=5 // pred_fallthru
        _
      %p245 = scmp.le.s32.totalorder 2, %s13
      // Predicated region
      $region41: #{split_layer.1} parent=5 // pred_check
        %p246 = pneg %p245
      $region42: #{split_layer.1} parent=5 // pred_check_branch
        %248 = sbr.rel (%p246) target = $region44
      $region43: #{split_layer.1} parent=5 // pred_region
        %s249 = ssub.s32 %s13, 2
        // Predicated region
        $region45: #{split_layer.1} parent=43 // pred_check
          %p250 = pneg %p68
        $region46: #{split_layer.1} parent=43 // pred_check_branch
          %252 = sbr.rel (%p250) target = $region48
        $region47: #{split_layer.1} parent=43 // pred_region
          %p253 = scmp.lt.s32.totalorder %s19, 3
          %s254 = scalar_select %p253, %s19, 3
          %s255 = smul.addr %s254, 8
          %s256 = scalar_lea.vmem %s1, %s255
        $region48: #{split_layer.1} parent=43 // pred_fallthru
          _
        // Predicated region
        $region49: #{split_layer.1} parent=43 // pred_check
          %p257 = pneg %p94
        $region50: #{split_layer.1} parent=43 // pred_check_branch
          %259 = sbr.rel (%p257) target = $region52
        $region51: #{split_layer.1} parent=43 // pred_region
          %p260 = scmp.lt.s32.totalorder %s19, 3
          %s261 = scalar_select %p260, %s19, 3
          %s262 = smul.addr %s261, 8
          %s263 = scalar_lea.vmem %s2, %s262
        $region52: #{split_layer.1} parent=43 // pred_fallthru
          _
        // Predicated region
        $region53: #{split_layer.1} parent=43 // pred_check
          %p264 = pneg %p120
        $region54: #{split_layer.1} parent=43 // pred_check_branch
          %266 = sbr.rel (%p264) target = $region56
        $region55: #{split_layer.1} parent=43 // pred_region
          %p267 = scmp.lt.s32.totalorder %s19, 3
          %s268 = scalar_select %p267, %s19, 3
          %s269 = smul.addr %s268, 8
          %s270 = scalar_lea.vmem %s3, %s269
        $region56: #{split_layer.1} parent=43 // pred_fallthru
          _
      $region44: #{split_layer.1} parent=5 // pred_fallthru
        _
    $region6: #{split_layer.1} parent=1 // loop_footer
      %s17 = sadd.s32 1, %s13
    $region7: #{split_layer.1} parent=1 // loop_footer_branch
      %12 = sbr.rel target = $region3
    $region8: #{split_layer.1} parent=1 // loop_exit
      _
    %271 = vsyncpa [#allocation3], 1
    %s272 = scalar_lea.sflag [#allocation3], 1
    %273 = vsyncpa %s272, 1

</llo_original>
